<compile_context>
chip_gen: v5e
topology: v5e:2x2
jax: 0.10.0
libtpu: 0.0.40
codegen_flags: <defaults>
</compile_context>

<pallas_src>
import numpy as np
import jax
import jax.numpy as jnp
from jax.experimental import pallas as pl
from jax.experimental.pallas import tpu as pltpu

LANE = 128


def _round_up(n, m):
    return ((n + m - 1) // m) * m


# --------------------------------------------------------------------------------------
# Kernel: one grid step == one time tile, all series fused.
#   refs = (ax, W0f, b0f, [Wl_blockdiag, bl]*, out)
#     ax : (t_tile, lag*p)   bf16 im2col slab for this time tile
#     W0f: (lag*p, N0_pad)   bf16 fused+masked first-layer weight (grid-invariant)
#     Wl : (N_{l-1}_pad, N_l_pad)  bf16 block-diagonal 1x1-conv weights (grid-invariant)
#     b* : (1, N_pad)        f32 biases
#     out: (t_tile, N_last_pad)  lane-dense f32 padded output slab
# --------------------------------------------------------------------------------------
def _cmlp_fused_kernel(*refs):
    ax_ref = refs[0]
    w0_ref, b0_ref = refs[1], refs[2]
    layer_refs = refs[3:-1]
    out_ref = refs[-1]

    # Layer 0: single K = lag*p matmul, bf16 operands, f32 accumulation in the MXU.
    h = jnp.dot(ax_ref[...], w0_ref[...], preferred_element_type=jnp.float32)
    h = h + b0_ref[...]

    # Remaining layers: relu then block-diagonal (all-series) linear.
    for li in range(len(layer_refs) // 2):
        w_ref = layer_refs[2 * li]
        b_ref = layer_refs[2 * li + 1]
        h = jnp.maximum(h, 0.0)                                   # activation='relu'
        h = jnp.dot(h.astype(w_ref.dtype), w_ref[...],
                    preferred_element_type=jnp.float32) + b_ref[...]

    out_ref[...] = h.astype(out_ref.dtype)


# --------------------------------------------------------------------------------------
# Generation-aware budgets (VMEM limit, time-tile cap, minimum #tiles for megacore).
# --------------------------------------------------------------------------------------
def _tpu_budget():
    vmem_cap = 128 * 1024 * 1024
    try:
        info = pltpu.get_tpu_info()
        vmem_cap = int(getattr(info, "vmem_capacity_bytes", vmem_cap) or vmem_cap)
    except Exception:
        pass
    if vmem_cap <= 64 * 1024 * 1024:
        # v7x-class: 64 MiB VMEM, 2 TensorCores -> conservative tiles, >=2 time tiles.
        return {"t_cap": 512, "vmem_limit": 48 * 1024 * 1024, "min_tiles": 2}
    # v5e / v6e: 128 MiB VMEM, 1 TensorCore -> bigger tiles amortize grid-step overhead.
    return {"t_cap": 1024, "vmem_limit": 64 * 1024 * 1024, "min_tiles": 1}


# --------------------------------------------------------------------------------------
# One-time (per parameter set) weight fusion.  Host numpy: no per-call XLA preprocessing
# and no (p, d_in, p, d_out) eye-outer-product device temp.
# --------------------------------------------------------------------------------------
def prepare_cmlp_fused_params(sparsity, W0, b0, layer_params, lag,
                              compute_dtype=jnp.bfloat16):
    W0 = np.asarray(W0, np.float32)                  # (p, H0, p, lag)
    b0 = np.asarray(b0, np.float32)                  # (p, H0)
    mask = np.asarray(sparsity, np.float32)          # (p, p)
    p, H0 = W0.shape[0], W0.shape[1]
    K0 = lag * p
    N0 = p * H0
    N0_pad = _round_up(N0, LANE)

    # Fused, sparsity-masked first-layer weight: row k*p+c, col s*H0+h.
    w0m = W0 * mask[:, None, :, None]                # (p, H0, p, lag)
    w0f = np.transpose(w0m, (3, 2, 0, 1)).reshape(K0, N0)
    b0f = b0.reshape(1, N0)
    if N0_pad > N0:
        w0f = np.pad(w0f, ((0, 0), (0, N0_pad - N0)))
        b0f = np.pad(b0f, ((0, 0), (0, N0_pad - N0)))

    fused_layers = []
    prev_n, prev_pad = N0, N0_pad
    for (Wl, bl) in layer_params:                    # Wl: (p, d_out, d_in), bl: (p, d_out)
        Wl = np.asarray(Wl, np.float32)
        bl = np.asarray(bl, np.float32)
        p_, d_out, d_in = Wl.shape
        assert p_ == p and p * d_in == prev_n
        cur_n = p * d_out
        cur_pad = _round_up(cur_n, LANE)
        bd = np.zeros((prev_pad, cur_pad), np.float32)
        for s in range(p):                           # block-diagonal placement
            bd[s * d_in:(s + 1) * d_in, s * d_out:(s + 1) * d_out] = Wl[s].T
        bf = np.zeros((1, cur_pad), np.float32)
        bf[0, :cur_n] = bl.reshape(-1)
        fused_layers.append((jnp.asarray(bd, compute_dtype),
                             jnp.asarray(bf, jnp.float32)))
        prev_n, prev_pad = cur_n, cur_pad

    return {
        "p": p, "lag": lag, "K0": K0, "N0_pad": N0_pad, "n_out_pad": prev_pad,
        "w0f": jnp.asarray(w0f, compute_dtype),
        "b0f": jnp.asarray(b0f, jnp.float32),
        "layers": fused_layers,
        "compute_dtype": compute_dtype,
    }


# --------------------------------------------------------------------------------------
# Forward.  X: (1, T, p).  Returns (1, T_out, p), T_out = T - lag + 1.
# --------------------------------------------------------------------------------------
def cmlp_sparse_forward(X, fused):
    assert X.shape[0] == 1, "MLP.forward in the reference ignores batch; batch must be 1"
    cdt = fused["compute_dtype"]
    lag = fused["lag"]
    p = fused["p"]
    K0 = fused["K0"]
    N0_pad = fused["N0_pad"]
    n_out_pad = fused["n_out_pad"]

    x = X[0].astype(cdt)                             # (T, p)
    T, p_in = x.shape
    assert p_in == p
    t_out = T - lag + 1

    # ---- generation-aware time tiling ----
    budget = _tpu_budget()
    t_out_8 = _round_up(t_out, 8)
    t_tile = min(budget["t_cap"], t_out_8)
    if budget["min_tiles"] > 1 and t_out_8 > 8:
        # Guarantee >= min_tiles tiles so the "parallel" axis can split across TCs (v7x).
        t_tile = min(t_tile, _round_up(-(-t_out_8 // budget["min_tiles"]), 8))
    t_tile = max(t_tile, 8)
    t_out_pad = _round_up(t_out, t_tile)
    grid = (t_out_pad // t_tile,)

    # ---- im2col slab: ax[t, k*p + c] = x[t + k, c]  (bf16) ----
    ax = jnp.concatenate([x[k:k + t_out] for k in range(lag)], axis=1)  # (t_out, lag*p)
    if t_out_pad > t_out:
        ax = jnp.pad(ax, ((0, t_out_pad - t_out), (0, 0)))

    args = [ax, fused["w0f"], fused["b0f"]]
    for (bd, bf) in fused["layers"]:
        args += [bd, bf]

    # ---- advisory cost estimate ----
    flops = 2 * t_out_pad * K0 * N0_pad
    for (bd, _) in fused["layers"]:
        flops += 2 * t_out_pad * bd.shape[0] * bd.shape[1]
    bytes_accessed = sum(int(np.prod(a.shape)) * a.dtype.itemsize for a in args)
    bytes_accessed += t_out_pad * n_out_pad * 4
    cost = pl.CostEstimate(flops=int(flops), transcendentals=0,
                           bytes_accessed=int(bytes_accessed))

    def run(single_buffer_weights):
        # Grid-invariant weights/biases: index_map is constant -> single-buffer them to
        # halve resident weight VMEM.  ax and out stay default (double) buffered.
        wkw = ({"pipeline_mode": pl.Buffered(1)} if single_buffer_weights else {})
        in_specs = [
            pl.BlockSpec((t_tile, K0), lambda t: (t, 0)),               # time-tiled slab
            pl.BlockSpec((K0, N0_pad), lambda t: (0, 0), **wkw),        # resident weights
            pl.BlockSpec((1, N0_pad), lambda t: (0, 0), **wkw),
        ]
        for (bd, bf) in fused["layers"]:
            in_specs.append(pl.BlockSpec(bd.shape, lambda t: (0, 0), **wkw))
            in_specs.append(pl.BlockSpec(bf.shape, lambda t: (0, 0), **wkw))
        out_spec = pl.BlockSpec((t_tile, n_out_pad), lambda t: (t, 0))  # lane-dense store

        return pl.pallas_call(
            _cmlp_fused_kernel,
            out_shape=jax.ShapeDtypeStruct((t_out_pad, n_out_pad), jnp.float32),
            grid=grid,
            in_specs=in_specs,
            out_specs=out_spec,
            compiler_params=pltpu.CompilerParams(
                dimension_semantics=("parallel",),      # time tiles shard across TCs
                vmem_limit_bytes=budget["vmem_limit"],
            ),
            cost_estimate=cost,
        )(*args)

    try:
        out = run(single_buffer_weights=True)
    except Exception:
        # Fallback if this jax build rejects pipeline_mode on pallas_call BlockSpecs.
        out = run(single_buffer_weights=False)

    return out[None, :t_out, :p]                                        # (1, T_out, p)


# --------------------------------------------------------------------------------------
# Plain-numpy reference mirroring the PyTorch per-series gather + conv (f32).
# --------------------------------------------------------------------------------------
def reference_forward(X, sparsity_np, W0, b0, layer_params, lag):
    x = np.asarray(X[0], np.float32)
    T, p = x.shape
    t_out = T - lag + 1
    cols = []
    for s in range(p):
        idx = np.nonzero(sparsity_np[s])[0]
        xs = x[:, idx]                                    # (T, n_in)
        W0s = np.asarray(W0)[s][:, idx, :]                # (H0, n_in, lag)
        h = np.zeros((t_out, W0s.shape[0]), np.float32)
        for k in range(lag):
            h = h + xs[k:k + t_out] @ W0s[:, :, k].T
        h = h + np.asarray(b0)[s]
        for (Wl, bl) in layer_params:
            h = np.maximum(h, 0.0)
            h = h @ np.asarray(Wl)[s].T + np.asarray(bl)[s]
        cols.append(h)                                    # (T_out, 1)
    return np.concatenate(cols, axis=1)[None]             # (1, T_out, p)


if __name__ == "__main__":
    # Small, deterministic configuration.
    p = 4            # num_series
    T = 37
    lag = 6          # -> T_out = 32
    hidden = [32, 32]

    # Deterministic sparsity pattern (numpy bool, as the torch byte tensor would be).
    sparsity = np.array([[((i + j) % 2 == 0) or (i == j) for j in range(p)]
                         for i in range(p)], dtype=bool)

    key = jax.random.PRNGKey(0)
    k_x, k_w0, k_b0, k_w1, k_b1, k_w2, k_b2 = jax.random.split(key, 7)

    X = jax.random.normal(k_x, (1, T, p), jnp.float32)

    # Per-series parameters (full-width first-layer weight; non-selected columns are
    # masked to zero, which is equivalent to the per-series Conv1d(n_in_s, H0, lag)).
    W0 = 0.1 * jax.random.normal(k_w0, (p, hidden[0], p, lag), jnp.float32)
    b0 = 0.1 * jax.random.normal(k_b0, (p, hidden[0]), jnp.float32)
    W1 = 0.1 * jax.random.normal(k_w1, (p, hidden[1], hidden[0]), jnp.float32)
    b1 = 0.1 * jax.random.normal(k_b1, (p, hidden[1]), jnp.float32)
    W2 = 0.1 * jax.random.normal(k_w2, (p, 1, hidden[1]), jnp.float32)
    b2 = 0.1 * jax.random.normal(k_b2, (p, 1), jnp.float32)
    layer_params = [(W1, b1), (W2, b2)]

    # One-time weight fusion (hoisted out of the per-call path).
    fused = prepare_cmlp_fused_params(sparsity, W0, b0, layer_params, lag,
                                      compute_dtype=jnp.bfloat16)

    out = cmlp_sparse_forward(X, fused)
    out = jax.block_until_ready(out)

    ref = reference_forward(X, sparsity, W0, b0, layer_params, lag)
    # bf16 MXU operands with f32 accumulation: loosen tolerance vs. the f32 reference.
    np.testing.assert_allclose(np.asarray(out, np.float32), ref, rtol=2e-2, atol=2e-2)

    print("KERNEL_OK")
</pallas_src>

<mosaic_0001>
module attributes {stable_mosaic.version = 11 : i64} {
  func.func @_cmlp_fused_kernel(%arg0: i32, %arg1: memref<32x24xbf16, #tpu.memory_space<vmem>>, %arg2: memref<24x128xbf16, #tpu.memory_space<vmem>>, %arg3: memref<1x128xf32, #tpu.memory_space<vmem>>, %arg4: memref<128x128xbf16, #tpu.memory_space<vmem>>, %arg5: memref<1x128xf32, #tpu.memory_space<vmem>>, %arg6: memref<128x128xbf16, #tpu.memory_space<vmem>>, %arg7: memref<1x128xf32, #tpu.memory_space<vmem>>, %arg8: memref<32x128xf32, #tpu.memory_space<vmem>>) attributes {dimension_semantics = [#tpu.dimension_semantics<parallel>], iteration_bounds = array<i64: 1>, scalar_prefetch = 0 : i64, scratch_operands = 0 : i64, tpu.core_type = #tpu.core_type<tc>, window_params = [{transform_indices = @transform_0, window_bounds = array<i64: 32, 24>}, {pipeline_mode = #tpu.pipeline_mode<synchronous>, transform_indices = @transform_1, window_bounds = array<i64: 24, 128>}, {pipeline_mode = #tpu.pipeline_mode<synchronous>, transform_indices = @transform_2, window_bounds = array<i64: 1, 128>}, {pipeline_mode = #tpu.pipeline_mode<synchronous>, transform_indices = @transform_3, window_bounds = array<i64: 128, 128>}, {pipeline_mode = #tpu.pipeline_mode<synchronous>, transform_indices = @transform_4, window_bounds = array<i64: 1, 128>}, {pipeline_mode = #tpu.pipeline_mode<synchronous>, transform_indices = @transform_5, window_bounds = array<i64: 128, 128>}, {pipeline_mode = #tpu.pipeline_mode<synchronous>, transform_indices = @transform_6, window_bounds = array<i64: 1, 128>}, {transform_indices = @transform_7, window_bounds = array<i64: 32, 128>}]} {
    %c0 = arith.constant 0 : index
    %c0_0 = arith.constant 0 : index
    %0 = vector.load %arg1[%c0, %c0_0] : memref<32x24xbf16, #tpu.memory_space<vmem>>, vector<32x24xbf16>
    %c0_1 = arith.constant 0 : index
    %c0_2 = arith.constant 0 : index
    %1 = vector.load %arg2[%c0_1, %c0_2] : memref<24x128xbf16, #tpu.memory_space<vmem>>, vector<24x128xbf16>
    %cst = arith.constant dense<0.000000e+00> : vector<32x128xf32>
    %2 = tpu.matmul %0, %1, %cst {dimension_numbers = #tpu.dot_dimension_numbers<[1], [0], [0], [1], [0, 0, 1, 1], [], []>} : vector<32x24xbf16>, vector<24x128xbf16>, vector<32x128xf32> -> vector<32x128xf32>
    %c0_3 = arith.constant 0 : index
    %c0_4 = arith.constant 0 : index
    %3 = vector.load %arg3[%c0_3, %c0_4] : memref<1x128xf32, #tpu.memory_space<vmem>>, vector<1x128xf32>
    %4 = vector.broadcast %3 : vector<1x128xf32> to vector<32x128xf32>
    %5 = arith.addf %2, %4 : vector<32x128xf32>
    %cst_5 = arith.constant 0.000000e+00 : f32
    %6 = vector.broadcast %cst_5 : f32 to vector<32x128xf32>
    %7 = arith.maximumf %5, %6 : vector<32x128xf32>
    %8 = arith.truncf %7 : vector<32x128xf32> to vector<32x128xbf16>
    %c0_6 = arith.constant 0 : index
    %c0_7 = arith.constant 0 : index
    %9 = vector.load %arg4[%c0_6, %c0_7] : memref<128x128xbf16, #tpu.memory_space<vmem>>, vector<128x128xbf16>
    %cst_8 = arith.constant dense<0.000000e+00> : vector<32x128xf32>
    %10 = tpu.matmul %8, %9, %cst_8 {dimension_numbers = #tpu.dot_dimension_numbers<[1], [0], [0], [1], [0, 0, 1, 1], [], []>} : vector<32x128xbf16>, vector<128x128xbf16>, vector<32x128xf32> -> vector<32x128xf32>
    %c0_9 = arith.constant 0 : index
    %c0_10 = arith.constant 0 : index
    %11 = vector.load %arg5[%c0_9, %c0_10] : memref<1x128xf32, #tpu.memory_space<vmem>>, vector<1x128xf32>
    %12 = vector.broadcast %11 : vector<1x128xf32> to vector<32x128xf32>
    %13 = arith.addf %10, %12 : vector<32x128xf32>
    %cst_11 = arith.constant 0.000000e+00 : f32
    %14 = vector.broadcast %cst_11 : f32 to vector<32x128xf32>
    %15 = arith.maximumf %13, %14 : vector<32x128xf32>
    %16 = arith.truncf %15 : vector<32x128xf32> to vector<32x128xbf16>
    %c0_12 = arith.constant 0 : index
    %c0_13 = arith.constant 0 : index
    %17 = vector.load %arg6[%c0_12, %c0_13] : memref<128x128xbf16, #tpu.memory_space<vmem>>, vector<128x128xbf16>
    %cst_14 = arith.constant dense<0.000000e+00> : vector<32x128xf32>
    %18 = tpu.matmul %16, %17, %cst_14 {dimension_numbers = #tpu.dot_dimension_numbers<[1], [0], [0], [1], [0, 0, 1, 1], [], []>} : vector<32x128xbf16>, vector<128x128xbf16>, vector<32x128xf32> -> vector<32x128xf32>
    %c0_15 = arith.constant 0 : index
    %c0_16 = arith.constant 0 : index
    %19 = vector.load %arg7[%c0_15, %c0_16] : memref<1x128xf32, #tpu.memory_space<vmem>>, vector<1x128xf32>
    %20 = vector.broadcast %19 : vector<1x128xf32> to vector<32x128xf32>
    %21 = arith.addf %18, %20 : vector<32x128xf32>
    %c0_17 = arith.constant 0 : index
    %c0_18 = arith.constant 0 : index
    %22 = vector.load %arg8[%c0_17, %c0_18] : memref<32x128xf32, #tpu.memory_space<vmem>>, vector<32x128xf32>
    tpu.vector_store %arg8[%c0_17, %c0_18], %21 {strides = array<i32>} : memref<32x128xf32, #tpu.memory_space<vmem>>, vector<32x128xf32>,
    return
  }
  func.func @transform_0(%arg0: i32) -> (i32, i32) {
    %c0_i32 = arith.constant 0 : i32
    %c0_i32_0 = arith.constant 0 : i32
    return %arg0, %c0_i32 : i32, i32
  }
  func.func @transform_1(%arg0: i32) -> (i32, i32) {
    %c0_i32 = arith.constant 0 : i32
    %c0_i32_0 = arith.constant 0 : i32
    %c0_i32_1 = arith.constant 0 : i32
    return %c0_i32, %c0_i32_0 : i32, i32
  }
  func.func @transform_2(%arg0: i32) -> (i32, i32) {
    %c0_i32 = arith.constant 0 : i32
    %c0_i32_0 = arith.constant 0 : i32
    %c0_i32_1 = arith.constant 0 : i32
    return %c0_i32, %c0_i32_0 : i32, i32
  }
  func.func @transform_3(%arg0: i32) -> (i32, i32) {
    %c0_i32 = arith.constant 0 : i32
    %c0_i32_0 = arith.constant 0 : i32
    %c0_i32_1 = arith.constant 0 : i32
    return %c0_i32, %c0_i32_0 : i32, i32
  }
  func.func @transform_4(%arg0: i32) -> (i32, i32) {
    %c0_i32 = arith.constant 0 : i32
    %c0_i32_0 = arith.constant 0 : i32
    %c0_i32_1 = arith.constant 0 : i32
    return %c0_i32, %c0_i32_0 : i32, i32
  }
  func.func @transform_5(%arg0: i32) -> (i32, i32) {
    %c0_i32 = arith.constant 0 : i32
    %c0_i32_0 = arith.constant 0 : i32
    %c0_i32_1 = arith.constant 0 : i32
    return %c0_i32, %c0_i32_0 : i32, i32
  }
  func.func @transform_6(%arg0: i32) -> (i32, i32) {
    %c0_i32 = arith.constant 0 : i32
    %c0_i32_0 = arith.constant 0 : i32
    %c0_i32_1 = arith.constant 0 : i32
    return %c0_i32, %c0_i32_0 : i32, i32
  }
  func.func @transform_7(%arg0: i32) -> (i32, i32) {
    %c0_i32 = arith.constant 0 : i32
    %c0_i32_0 = arith.constant 0 : i32
    return %arg0, %c0_i32 : i32, i32
  }
}

module attributes {stable_mosaic.version = 11 : i64} {
  func.func @_cmlp_fused_kernel(%arg0: i32, %arg1: memref<32x24xbf16, #tpu.memory_space<vmem>>, %arg2: memref<24x128xbf16, #tpu.memory_space<vmem>>, %arg3: memref<1x128xf32, #tpu.memory_space<vmem>>, %arg4: memref<128x128xbf16, #tpu.memory_space<vmem>>, %arg5: memref<1x128xf32, #tpu.memory_space<vmem>>, %arg6: memref<128x128xbf16, #tpu.memory_space<vmem>>, %arg7: memref<1x128xf32, #tpu.memory_space<vmem>>, %arg8: memref<32x128xf32, #tpu.memory_space<vmem>>) attributes {dimension_semantics = [#tpu.dimension_semantics<parallel>], iteration_bounds = array<i64: 1>, scalar_prefetch = 0 : i64, scratch_operands = 0 : i64, tpu.core_type = #tpu.core_type<tc>, window_params = [{transform_indices = @transform_0, window_bounds = array<i64: 32, 24>}, {pipeline_mode = #tpu.pipeline_mode<synchronous>, transform_indices = @transform_1, window_bounds = array<i64: 24, 128>}, {pipeline_mode = #tpu.pipeline_mode<synchronous>, transform_indices = @transform_2, window_bounds = array<i64: 1, 128>}, {pipeline_mode = #tpu.pipeline_mode<synchronous>, transform_indices = @transform_3, window_bounds = array<i64: 128, 128>}, {pipeline_mode = #tpu.pipeline_mode<synchronous>, transform_indices = @transform_4, window_bounds = array<i64: 1, 128>}, {pipeline_mode = #tpu.pipeline_mode<synchronous>, transform_indices = @transform_5, window_bounds = array<i64: 128, 128>}, {pipeline_mode = #tpu.pipeline_mode<synchronous>, transform_indices = @transform_6, window_bounds = array<i64: 1, 128>}, {transform_indices = @transform_7, window_bounds = array<i64: 32, 128>}]} {
    %c0 = arith.constant 0 : index
    %c0_0 = arith.constant 0 : index
    %0 = vector.load %arg1[%c0, %c0_0] : memref<32x24xbf16, #tpu.memory_space<vmem>>, vector<32x24xbf16>
    %c0_1 = arith.constant 0 : index
    %c0_2 = arith.constant 0 : index
    %1 = vector.load %arg2[%c0_1, %c0_2] : memref<24x128xbf16, #tpu.memory_space<vmem>>, vector<24x128xbf16>
    %cst = arith.constant dense<0.000000e+00> : vector<32x128xf32>
    %2 = tpu.matmul %0, %1, %cst {dimension_numbers = #tpu.dot_dimension_numbers<[1], [0], [0], [1], [0, 0, 1, 1], [], []>} : vector<32x24xbf16>, vector<24x128xbf16>, vector<32x128xf32> -> vector<32x128xf32>
    %c0_3 = arith.constant 0 : index
    %c0_4 = arith.constant 0 : index
    %3 = vector.load %arg3[%c0_3, %c0_4] : memref<1x128xf32, #tpu.memory_space<vmem>>, vector<1x128xf32>
    %4 = vector.broadcast %3 : vector<1x128xf32> to vector<32x128xf32>
    %5 = arith.addf %2, %4 : vector<32x128xf32>
    %cst_5 = arith.constant 0.000000e+00 : f32
    %6 = vector.broadcast %cst_5 : f32 to vector<32x128xf32>
    %7 = arith.maximumf %5, %6 : vector<32x128xf32>
    %8 = arith.truncf %7 : vector<32x128xf32> to vector<32x128xbf16>
    %c0_6 = arith.constant 0 : index
    %c0_7 = arith.constant 0 : index
    %9 = vector.load %arg4[%c0_6, %c0_7] : memref<128x128xbf16, #tpu.memory_space<vmem>>, vector<128x128xbf16>
    %cst_8 = arith.constant dense<0.000000e+00> : vector<32x128xf32>
    %10 = tpu.matmul %8, %9, %cst_8 {dimension_numbers = #tpu.dot_dimension_numbers<[1], [0], [0], [1], [0, 0, 1, 1], [], []>} : vector<32x128xbf16>, vector<128x128xbf16>, vector<32x128xf32> -> vector<32x128xf32>
    %c0_9 = arith.constant 0 : index
    %c0_10 = arith.constant 0 : index
    %11 = vector.load %arg5[%c0_9, %c0_10] : memref<1x128xf32, #tpu.memory_space<vmem>>, vector<1x128xf32>
    %12 = vector.broadcast %11 : vector<1x128xf32> to vector<32x128xf32>
    %13 = arith.addf %10, %12 : vector<32x128xf32>
    %cst_11 = arith.constant 0.000000e+00 : f32
    %14 = vector.broadcast %cst_11 : f32 to vector<32x128xf32>
    %15 = arith.maximumf %13, %14 : vector<32x128xf32>
    %16 = arith.truncf %15 : vector<32x128xf32> to vector<32x128xbf16>
    %c0_12 = arith.constant 0 : index
    %c0_13 = arith.constant 0 : index
    %17 = vector.load %arg6[%c0_12, %c0_13] : memref<128x128xbf16, #tpu.memory_space<vmem>>, vector<128x128xbf16>
    %cst_14 = arith.constant dense<0.000000e+00> : vector<32x128xf32>
    %18 = tpu.matmul %16, %17, %cst_14 {dimension_numbers = #tpu.dot_dimension_numbers<[1], [0], [0], [1], [0, 0, 1, 1], [], []>} : vector<32x128xbf16>, vector<128x128xbf16>, vector<32x128xf32> -> vector<32x128xf32>
    %c0_15 = arith.constant 0 : index
    %c0_16 = arith.constant 0 : index
    %19 = vector.load %arg7[%c0_15, %c0_16] : memref<1x128xf32, #tpu.memory_space<vmem>>, vector<1x128xf32>
    %20 = vector.broadcast %19 : vector<1x128xf32> to vector<32x128xf32>
    %21 = arith.addf %18, %20 : vector<32x128xf32>
    %c0_17 = arith.constant 0 : index
    %c0_18 = arith.constant 0 : index
    %22 = vector.load %arg8[%c0_17, %c0_18] : memref<32x128xf32, #tpu.memory_space<vmem>>, vector<32x128xf32>
    tpu.vector_store %arg8[%c0_17, %c0_18], %21 {strides = array<i32>} : memref<32x128xf32, #tpu.memory_space<vmem>>, vector<32x128xf32>,
    return
  }
  func.func @transform_0(%arg0: i32) -> (i32, i32) {
    %c0_i32 = arith.constant 0 : i32
    %c0_i32_0 = arith.constant 0 : i32
    return %arg0, %c0_i32 : i32, i32
  }
  func.func @transform_1(%arg0: i32) -> (i32, i32) {
    %c0_i32 = arith.constant 0 : i32
    %c0_i32_0 = arith.constant 0 : i32
    %c0_i32_1 = arith.constant 0 : i32
    return %c0_i32, %c0_i32_0 : i32, i32
  }
  func.func @transform_2(%arg0: i32) -> (i32, i32) {
    %c0_i32 = arith.constant 0 : i32
    %c0_i32_0 = arith.constant 0 : i32
    %c0_i32_1 = arith.constant 0 : i32
    return %c0_i32, %c0_i32_0 : i32, i32
  }
  func.func @transform_3(%arg0: i32) -> (i32, i32) {
    %c0_i32 = arith.constant 0 : i32
    %c0_i32_0 = arith.constant 0 : i32
    %c0_i32_1 = arith.constant 0 : i32
    return %c0_i32, %c0_i32_0 : i32, i32
  }
  func.func @transform_4(%arg0: i32) -> (i32, i32) {
    %c0_i32 = arith.constant 0 : i32
    %c0_i32_0 = arith.constant 0 : i32
    %c0_i32_1 = arith.constant 0 : i32
    return %c0_i32, %c0_i32_0 : i32, i32
  }
  func.func @transform_5(%arg0: i32) -> (i32, i32) {
    %c0_i32 = arith.constant 0 : i32
    %c0_i32_0 = arith.constant 0 : i32
    %c0_i32_1 = arith.constant 0 : i32
    return %c0_i32, %c0_i32_0 : i32, i32
  }
  func.func @transform_6(%arg0: i32) -> (i32, i32) {
    %c0_i32 = arith.constant 0 : i32
    %c0_i32_0 = arith.constant 0 : i32
    %c0_i32_1 = arith.constant 0 : i32
    return %c0_i32, %c0_i32_0 : i32, i32
  }
  func.func @transform_7(%arg0: i32) -> (i32, i32) {
    %c0_i32 = arith.constant 0 : i32
    %c0_i32_0 = arith.constant 0 : i32
    return %arg0, %c0_i32 : i32, i32
  }
}

</mosaic_0001>

<llo_original>
// kernel: tpu_custom_call.1
$region0: #{tpu_custom_call.1}
  #allocation0 [shape = 'u32[]', space=smem, size = 0x4, offset = 0x4, fixed_abs, tag = 'smem constant byte address 0x4 - core index']
  #allocation1 [shape = 'u32[72,128]{1,0:T(1,128)}', space=vmem, size = 0x9000, scoped, tag = 'internal scratch']
  %s0 = inlined_call_operand.vmem [shape: bf16[32,24], index: 0, kind: input, shape index: {}]
  %s1 = inlined_call_operand.vmem [shape: bf16[24,128], index: 1, kind: input, shape index: {}]
  %s2 = inlined_call_operand.vmem [shape: f32[1,128], index: 2, kind: input, shape index: {}]
  %s3 = inlined_call_operand.hbm [shape: bf16[128,128], index: 3, kind: input, shape index: {}]
  %s4 = inlined_call_operand.vmem [shape: f32[1,128], index: 4, kind: input, shape index: {}]
  %s5 = inlined_call_operand.hbm [shape: bf16[128,128], index: 5, kind: input, shape index: {}]
  %s6 = inlined_call_operand.vmem [shape: f32[1,128], index: 6, kind: input, shape index: {}]
  %s7 = inlined_call_operand.hbm [shape: f32[32,128], index: 7, kind: output, shape index: {}]
  %s8 = sld [smem:[#allocation0]]
  $region46: #{tpu_custom_call.1} parent=0
    _
  %s10 = ssub.s32 1, %s8
  %s11 = scalar_select 0, %s10, %s8
  $region1: #{tpu_custom_call.1} parent=0
    #allocation2 [shape = 'u8[32768]{0}', space=vmem, size = 0x8000, scoped, tag = 'input window, operand 3, single buffered']
    #allocation3 [shape = 's32[1]{0}', space=sflag, size = 0x4, scoped, tag = 'scoped memory for tpu_custom_call.1']
    #allocation4 [shape = 's32[1]{0}', space=sflag, size = 0x4, scoped, tag = 'scoped memory for tpu_custom_call.1']
    #allocation5 [shape = 'u8[32768]{0}', space=vmem, size = 0x8000, scoped, tag = 'input window, operand 5, single buffered']
    #allocation6 [shape = 's32[1]{0}', space=sflag, size = 0x4, scoped, tag = 'scoped memory for tpu_custom_call.1']
    #allocation7 [shape = 'u8[16384]{0}', space=vmem, size = 0x4000, scoped, tag = 'output window, operand 0, single buffered']
    %12 = vsyncpa [#allocation3], 0
    %13 = vsyncpa [#allocation6], 0
    %14 = vsyncpa [#allocation4], 0
    // Predicated region
    $region2: #{tpu_custom_call.1} parent=1 // pred_check
      _
    $region3: #{tpu_custom_call.1} parent=1 // pred_check_branch
      %16 = sbr.rel (0) target = $region5
    $region4: #{tpu_custom_call.1} parent=1 // pred_region
      _
    $region5: #{tpu_custom_call.1} parent=1 // pred_fallthru
      _
    // Predicated region
    $region6: #{tpu_custom_call.1} parent=1 // pred_check
      _
    $region7: #{tpu_custom_call.1} parent=1 // pred_check_branch
      %18 = sbr.rel (0) target = $region9
    $region8: #{tpu_custom_call.1} parent=1 // pred_region
      _
    $region9: #{tpu_custom_call.1} parent=1 // pred_fallthru
      _
    // Predicated region
    $region10: #{tpu_custom_call.1} parent=1 // pred_check
      _
    $region11: #{tpu_custom_call.1} parent=1 // pred_check_branch
      %20 = sbr.rel (0) target = $region13
    $region12: #{tpu_custom_call.1} parent=1 // pred_region
      _
    $region13: #{tpu_custom_call.1} parent=1 // pred_fallthru
      _
    // Predicated region
    $region14: #{tpu_custom_call.1} parent=1 // pred_check
      _
    $region15: #{tpu_custom_call.1} parent=1 // pred_check_branch
      %22 = sbr.rel (0) target = $region17
    $region16: #{tpu_custom_call.1} parent=1 // pred_region
      %24 = vsyncadd [#allocation3], 0
      %s25 = sshll.u32 %s3, 4
      %s26 = int_to_ptr.hbm [resolvable:$true] %s25
      %s27 = sshll.u32 [#allocation2], 4
      %s28 = int_to_ptr.vmem [resolvable:$true] %s27
      %33 = dma.hbm_to_vmem [thread:$0]  %s26, 1024, %s28, [#allocation3], 64, 64, 4
    $region17: #{tpu_custom_call.1} parent=1 // pred_fallthru
      _
    // Predicated region
    $region18: #{tpu_custom_call.1} parent=1 // pred_check
      _
    $region19: #{tpu_custom_call.1} parent=1 // pred_check_branch
      %35 = sbr.rel (0) target = $region21
    $region20: #{tpu_custom_call.1} parent=1 // pred_region
      _
    $region21: #{tpu_custom_call.1} parent=1 // pred_fallthru
      _
    // Predicated region
    $region22: #{tpu_custom_call.1} parent=1 // pred_check
      _
    $region23: #{tpu_custom_call.1} parent=1 // pred_check_branch
      %37 = sbr.rel (0) target = $region25
    $region24: #{tpu_custom_call.1} parent=1 // pred_region
      %39 = vsyncadd [#allocation6], 0
      %s40 = sshll.u32 %s5, 4
      %s41 = int_to_ptr.hbm [resolvable:$true] %s40
      %s42 = sshll.u32 [#allocation5], 4
      %s43 = int_to_ptr.vmem [resolvable:$true] %s42
      %48 = dma.hbm_to_vmem [thread:$0]  %s41, 1024, %s43, [#allocation6], 64, 64, 4
    $region25: #{tpu_custom_call.1} parent=1 // pred_fallthru
      _
    // Predicated region
    $region26: #{tpu_custom_call.1} parent=1 // pred_check
      _
    $region27: #{tpu_custom_call.1} parent=1 // pred_check_branch
      %50 = sbr.rel (0) target = $region29
    $region28: #{tpu_custom_call.1} parent=1 // pred_region
      _
    $region29: #{tpu_custom_call.1} parent=1 // pred_fallthru
      _
    // Predicated region
    $region30: #{tpu_custom_call.1} parent=1 // pred_check
      _
    $region31: #{tpu_custom_call.1} parent=1 // pred_check_branch
      %52 = sbr.rel (0) target = $region33
    $region32: #{tpu_custom_call.1} parent=1 // pred_region
      %54 = dma.done [#allocation3], 1024
    $region33: #{tpu_custom_call.1} parent=1 // pred_fallthru
      _
    // Predicated region
    $region34: #{tpu_custom_call.1} parent=1 // pred_check
      _
    $region35: #{tpu_custom_call.1} parent=1 // pred_check_branch
      %56 = sbr.rel (0) target = $region37
    $region36: #{tpu_custom_call.1} parent=1 // pred_region
      %58 = dma.done [#allocation6], 1024
    $region37: #{tpu_custom_call.1} parent=1 // pred_fallthru
      _
    %v60 = vld [vmem:[%s0] sm:$0xf]
    %v61 = vld [vmem:[%s0 + $0x4] sm:$0xf]
    %v62 = vld [vmem:[%s0 + $0x8] sm:$0xf]
    %v63 = vld [vmem:[%s0 + $0xc] sm:$0xf]
    %v64 = vld [vmem:[%s1] sm:$0xf]
    %v65 = vld [vmem:[%s1 + $0x4] sm:$0xf]
    %v66 = vld [vmem:[%s1 + $0x8] sm:$0xf]
    %v67 = vld [vmem:[%s2] sm:$0x1]
    %v69 = vperm.slane %v67, 0
    %v75 = vunpack.c.l.b16 %v60
    %v76 = vunpack.c.l.b16 %v61
    %v77 = vunpack.c.l.b16 %v62
    %v78 = vunpack.c.l.b16 %v63
    %v79 = vpack.c.b16 %v76, %v75
    %v80 = vpack.c.b16 %v78, %v77
    %v84 = vunpack.c.l.b16 %v64
    %v85 = vunpack.c.l.b16 %v65
    %v86 = vunpack.c.l.b16 %v66
    %v87 = vpack.c.b16 %v85, %v84
    %v88 = vpack.c.b16 %v86, %v86
    %vm90 = vcmask 195584
    %v92 = vsel %vm90, %v79, 0
    %v95 = vsel %vm90, %v80, 0
    %vm97 = vcmask 1043456
    %v99 = vsel %vm97, %v88, 0
    %101 = vmatpush.bf16.msra.mxu0 0
    %102 = vmatpush.bf16.msra.mxu0 0
    %103 = vmatpush.bf16.msra.mxu0 0
    %104 = vmatpush.bf16.msra.mxu0 0
    %105 = vmatpush.bf16.msra.mxu0 0
    %106 = vmatpush.bf16.msra.mxu0 0
    %107 = vmatpush.bf16.msra.mxu0 %v99
    %108 = vmatpush.bf16.msra.mxu0 %v87
    %109 = vmatmul.bf16.gmra.mxu0 %v92
    %v110 = vpop.f32.mrf.mxu0
    %v111 = vadd.f32 %v69, %v110
    %v112 = vpop.f32.mrf.mxu0
    %v113 = vadd.f32 %v69, %v112
    %114 = vmatmul.bf16.gmra.mxu0 %v95
    %v115 = vpop.f32.mrf.mxu0
    %v116 = vadd.f32 %v69, %v115
    %v117 = vpop.f32.mrf.mxu0
    %v118 = vadd.f32 %v69, %v117
    %119 = vdwg.mxu0
    %v120 = vmax.f32 %v111, 0.0
    %v121 = vmax.f32 %v113, 0.0
    %v122 = vmax.f32 %v116, 0.0
    %v123 = vmax.f32 %v118, 0.0
    %v124 = vpack.c.bf16 %v121, %v120
    %v125 = vpack.c.bf16 %v123, %v122
    %v126 = vld [vmem:[#allocation2] sm:$0xf]
    %v127 = vld [vmem:[#allocation2 + $0x4] sm:$0xf]
    %v128 = vld [vmem:[#allocation2 + $0x8] sm:$0xf]
    %v129 = vld [vmem:[#allocation2 + $0xc] sm:$0xf]
    %v130 = vld [vmem:[#allocation2 + $0x10] sm:$0xf]
    %v131 = vld [vmem:[#allocation2 + $0x14] sm:$0xf]
    %v132 = vld [vmem:[#allocation2 + $0x18] sm:$0xf]
    %v133 = vld [vmem:[#allocation2 + $0x1c] sm:$0xf]
    %v134 = vld [vmem:[#allocation2 + $0x20] sm:$0xf]
    %v135 = vld [vmem:[#allocation2 + $0x24] sm:$0xf]
    %v136 = vld [vmem:[#allocation2 + $0x28] sm:$0xf]
    %v137 = vld [vmem:[#allocation2 + $0x2c] sm:$0xf]
    %v138 = vld [vmem:[#allocation2 + $0x30] sm:$0xf]
    %v139 = vld [vmem:[#allocation2 + $0x34] sm:$0xf]
    %v140 = vld [vmem:[#allocation2 + $0x38] sm:$0xf]
    %v141 = vld [vmem:[#allocation2 + $0x3c] sm:$0xf]
    %v142 = vld [vmem:[%s4] sm:$0x1]
    %v144 = vperm.slane %v142, 0
    %v162 = vunpack.c.l.b16 %v126
    %v163 = vunpack.c.l.b16 %v127
    %v164 = vunpack.c.l.b16 %v128
    %v165 = vunpack.c.l.b16 %v129
    %v166 = vunpack.c.l.b16 %v130
    %v167 = vunpack.c.l.b16 %v131
    %v168 = vunpack.c.l.b16 %v132
    %v169 = vunpack.c.l.b16 %v133
    %v170 = vunpack.c.l.b16 %v134
    %v171 = vunpack.c.l.b16 %v135
    %v172 = vunpack.c.l.b16 %v136
    %v173 = vunpack.c.l.b16 %v137
    %v174 = vunpack.c.l.b16 %v138
    %v175 = vunpack.c.l.b16 %v139
    %v176 = vunpack.c.l.b16 %v140
    %v177 = vunpack.c.l.b16 %v141
    %v178 = vpack.c.b16 %v163, %v162
    %v179 = vpack.c.b16 %v165, %v164
    %v180 = vpack.c.b16 %v167, %v166
    %v181 = vpack.c.b16 %v169, %v168
    %v182 = vpack.c.b16 %v171, %v170
    %v183 = vpack.c.b16 %v173, %v172
    %v184 = vpack.c.b16 %v175, %v174
    %v185 = vpack.c.b16 %v177, %v176
    %194 = vmatpush.bf16.msra.mxu0 %v185
    %195 = vmatpush.bf16.msra.mxu0 %v184
    %196 = vmatpush.bf16.msra.mxu0 %v183
    %197 = vmatpush.bf16.msra.mxu0 %v182
    %198 = vmatpush.bf16.msra.mxu0 %v181
    %199 = vmatpush.bf16.msra.mxu0 %v180
    %200 = vmatpush.bf16.msra.mxu0 %v179
    %201 = vmatpush.bf16.msra.mxu0 %v178
    %202 = vmatmul.bf16.gmra.mxu0 %v124
    %v203 = vpop.f32.mrf.mxu0
    %v204 = vadd.f32 %v144, %v203
    %v205 = vpop.f32.mrf.mxu0
    %v206 = vadd.f32 %v144, %v205
    %207 = vmatmul.bf16.gmra.mxu0 %v125
    %v208 = vpop.f32.mrf.mxu0
    %v209 = vadd.f32 %v144, %v208
    %v210 = vpop.f32.mrf.mxu0
    %v211 = vadd.f32 %v144, %v210
    %212 = vdwg.mxu0
    %v213 = vmax.f32 %v204, 0.0
    %v214 = vmax.f32 %v206, 0.0
    %v215 = vmax.f32 %v209, 0.0
    %v216 = vmax.f32 %v211, 0.0
    %v217 = vpack.c.bf16 %v214, %v213
    %v218 = vpack.c.bf16 %v216, %v215
    %v219 = vld [vmem:[#allocation5] sm:$0xf]
    %v220 = vld [vmem:[#allocation5 + $0x4] sm:$0xf]
    %v221 = vld [vmem:[#allocation5 + $0x8] sm:$0xf]
    %v222 = vld [vmem:[#allocation5 + $0xc] sm:$0xf]
    %v223 = vld [vmem:[#allocation5 + $0x10] sm:$0xf]
    %v224 = vld [vmem:[#allocation5 + $0x14] sm:$0xf]
    %v225 = vld [vmem:[#allocation5 + $0x18] sm:$0xf]
    %v226 = vld [vmem:[#allocation5 + $0x1c] sm:$0xf]
    %v227 = vld [vmem:[#allocation5 + $0x20] sm:$0xf]
    %v228 = vld [vmem:[#allocation5 + $0x24] sm:$0xf]
    %v229 = vld [vmem:[#allocation5 + $0x28] sm:$0xf]
    %v230 = vld [vmem:[#allocation5 + $0x2c] sm:$0xf]
    %v231 = vld [vmem:[#allocation5 + $0x30] sm:$0xf]
    %v232 = vld [vmem:[#allocation5 + $0x34] sm:$0xf]
    %v233 = vld [vmem:[#allocation5 + $0x38] sm:$0xf]
    %v234 = vld [vmem:[#allocation5 + $0x3c] sm:$0xf]
    %v235 = vld [vmem:[%s6] sm:$0x1]
    %v237 = vperm.slane %v235, 0
    %v255 = vunpack.c.l.b16 %v219
    %v256 = vunpack.c.l.b16 %v220
    %v257 = vunpack.c.l.b16 %v221
    %v258 = vunpack.c.l.b16 %v222
    %v259 = vunpack.c.l.b16 %v223
    %v260 = vunpack.c.l.b16 %v224
    %v261 = vunpack.c.l.b16 %v225
    %v262 = vunpack.c.l.b16 %v226
    %v263 = vunpack.c.l.b16 %v227
    %v264 = vunpack.c.l.b16 %v228
    %v265 = vunpack.c.l.b16 %v229
    %v266 = vunpack.c.l.b16 %v230
    %v267 = vunpack.c.l.b16 %v231
    %v268 = vunpack.c.l.b16 %v232
    %v269 = vunpack.c.l.b16 %v233
    %v270 = vunpack.c.l.b16 %v234
    %v271 = vpack.c.b16 %v256, %v255
    %v272 = vpack.c.b16 %v258, %v257
    %v273 = vpack.c.b16 %v260, %v259
    %v274 = vpack.c.b16 %v262, %v261
    %v275 = vpack.c.b16 %v264, %v263
    %v276 = vpack.c.b16 %v266, %v265
    %v277 = vpack.c.b16 %v268, %v267
    %v278 = vpack.c.b16 %v270, %v269
    %287 = vmatpush.bf16.msra.mxu0 %v278
    %288 = vmatpush.bf16.msra.mxu0 %v277
    %289 = vmatpush.bf16.msra.mxu0 %v276
    %290 = vmatpush.bf16.msra.mxu0 %v275
    %291 = vmatpush.bf16.msra.mxu0 %v274
    %292 = vmatpush.bf16.msra.mxu0 %v273
    %293 = vmatpush.bf16.msra.mxu0 %v272
    %294 = vmatpush.bf16.msra.mxu0 %v271
    %295 = vmatmul.bf16.gmra.mxu0 %v217
    %v296 = vpop.f32.mrf.mxu0
    %v297 = vadd.f32 %v237, %v296
    %v298 = vpop.f32.mrf.mxu0
    %v299 = vadd.f32 %v237, %v298
    %300 = vmatmul.bf16.gmra.mxu0 %v218
    %v301 = vpop.f32.mrf.mxu0
    %v302 = vadd.f32 %v237, %v301
    %v303 = vpop.f32.mrf.mxu0
    %v304 = vadd.f32 %v237, %v303
    %305 = vdwg.mxu0
    %306 = vst [vmem:[#allocation7] sm:$0xff] %v297
    %307 = vst [vmem:[#allocation7 + $0x8] sm:$0xff] %v299
    %308 = vst [vmem:[#allocation7 + $0x10] sm:$0xff] %v302
    %309 = vst [vmem:[#allocation7 + $0x18] sm:$0xff] %v304
    // Predicated region
    $region38: #{tpu_custom_call.1} parent=1 // pred_check
      _
    $region39: #{tpu_custom_call.1} parent=1 // pred_check_branch
      %311 = sbr.rel (0) target = $region41
    $region40: #{tpu_custom_call.1} parent=1 // pred_region
      %313 = vsyncadd [#allocation4], 0
      %s314 = sshll.u32 [#allocation7], 4
      %s315 = int_to_ptr.vmem [resolvable:$true] %s314
      %s316 = sshll.u32 %s7, 4
      %s317 = int_to_ptr.hbm [resolvable:$true] %s316
      %322 = dma.vmem_to_hbm [thread:$0]  %s315, 512, %s317, [#allocation4], 128, 128, 8
    $region41: #{tpu_custom_call.1} parent=1 // pred_fallthru
      _
    // Predicated region
    $region42: #{tpu_custom_call.1} parent=1 // pred_check
      _
    $region43: #{tpu_custom_call.1} parent=1 // pred_check_branch
      %324 = sbr.rel (0) target = $region45
    $region44: #{tpu_custom_call.1} parent=1 // pred_region
      %326 = dma.done [#allocation4], 512
    $region45: #{tpu_custom_call.1} parent=1 // pred_fallthru
      _
    %327 = vsyncpa [#allocation3], 1
    %328 = vsyncpa [#allocation6], 1
    %329 = vsyncpa [#allocation4], 1

// kernel: tpu_custom_call.1
$region0: #{tpu_custom_call.1}
  #allocation0 [shape = 'u32[]', space=smem, size = 0x4, offset = 0x4, fixed_abs, tag = 'smem constant byte address 0x4 - core index']
  #allocation1 [shape = 'u32[72,128]{1,0:T(1,128)}', space=vmem, size = 0x9000, scoped, tag = 'internal scratch']
  %s0 = inlined_call_operand.vmem [shape: bf16[32,24], index: 0, kind: input, shape index: {}]
  %s1 = inlined_call_operand.vmem [shape: bf16[24,128], index: 1, kind: input, shape index: {}]
  %s2 = inlined_call_operand.vmem [shape: f32[1,128], index: 2, kind: input, shape index: {}]
  %s3 = inlined_call_operand.hbm [shape: bf16[128,128], index: 3, kind: input, shape index: {}]
  %s4 = inlined_call_operand.vmem [shape: f32[1,128], index: 4, kind: input, shape index: {}]
  %s5 = inlined_call_operand.hbm [shape: bf16[128,128], index: 5, kind: input, shape index: {}]
  %s6 = inlined_call_operand.vmem [shape: f32[1,128], index: 6, kind: input, shape index: {}]
  %s7 = inlined_call_operand.hbm [shape: f32[32,128], index: 7, kind: output, shape index: {}]
  %s8 = sld [smem:[#allocation0]]
  $region46: #{tpu_custom_call.1} parent=0
    _
  %s10 = ssub.s32 1, %s8
  %s11 = scalar_select 0, %s10, %s8
  $region1: #{tpu_custom_call.1} parent=0
    #allocation2 [shape = 'u8[32768]{0}', space=vmem, size = 0x8000, scoped, tag = 'input window, operand 3, single buffered']
    #allocation3 [shape = 's32[1]{0}', space=sflag, size = 0x4, scoped, tag = 'scoped memory for tpu_custom_call.1']
    #allocation4 [shape = 's32[1]{0}', space=sflag, size = 0x4, scoped, tag = 'scoped memory for tpu_custom_call.1']
    #allocation5 [shape = 'u8[32768]{0}', space=vmem, size = 0x8000, scoped, tag = 'input window, operand 5, single buffered']
    #allocation6 [shape = 's32[1]{0}', space=sflag, size = 0x4, scoped, tag = 'scoped memory for tpu_custom_call.1']
    #allocation7 [shape = 'u8[16384]{0}', space=vmem, size = 0x4000, scoped, tag = 'output window, operand 0, single buffered']
    %12 = vsyncpa [#allocation3], 0
    %13 = vsyncpa [#allocation6], 0
    %14 = vsyncpa [#allocation4], 0
    // Predicated region
    $region2: #{tpu_custom_call.1} parent=1 // pred_check
      _
    $region3: #{tpu_custom_call.1} parent=1 // pred_check_branch
      %16 = sbr.rel (0) target = $region5
    $region4: #{tpu_custom_call.1} parent=1 // pred_region
      _
    $region5: #{tpu_custom_call.1} parent=1 // pred_fallthru
      _
    // Predicated region
    $region6: #{tpu_custom_call.1} parent=1 // pred_check
      _
    $region7: #{tpu_custom_call.1} parent=1 // pred_check_branch
      %18 = sbr.rel (0) target = $region9
    $region8: #{tpu_custom_call.1} parent=1 // pred_region
      _
    $region9: #{tpu_custom_call.1} parent=1 // pred_fallthru
      _
    // Predicated region
    $region10: #{tpu_custom_call.1} parent=1 // pred_check
      _
    $region11: #{tpu_custom_call.1} parent=1 // pred_check_branch
      %20 = sbr.rel (0) target = $region13
    $region12: #{tpu_custom_call.1} parent=1 // pred_region
      _
    $region13: #{tpu_custom_call.1} parent=1 // pred_fallthru
      _
    // Predicated region
    $region14: #{tpu_custom_call.1} parent=1 // pred_check
      _
    $region15: #{tpu_custom_call.1} parent=1 // pred_check_branch
      %22 = sbr.rel (0) target = $region17
    $region16: #{tpu_custom_call.1} parent=1 // pred_region
      %24 = vsyncadd [#allocation3], 0
      %s25 = sshll.u32 %s3, 4
      %s26 = int_to_ptr.hbm [resolvable:$true] %s25
      %s27 = sshll.u32 [#allocation2], 4
      %s28 = int_to_ptr.vmem [resolvable:$true] %s27
      %33 = dma.hbm_to_vmem [thread:$0]  %s26, 1024, %s28, [#allocation3], 64, 64, 4
    $region17: #{tpu_custom_call.1} parent=1 // pred_fallthru
      _
    // Predicated region
    $region18: #{tpu_custom_call.1} parent=1 // pred_check
      _
    $region19: #{tpu_custom_call.1} parent=1 // pred_check_branch
      %35 = sbr.rel (0) target = $region21
    $region20: #{tpu_custom_call.1} parent=1 // pred_region
      _
    $region21: #{tpu_custom_call.1} parent=1 // pred_fallthru
      _
    // Predicated region
    $region22: #{tpu_custom_call.1} parent=1 // pred_check
      _
    $region23: #{tpu_custom_call.1} parent=1 // pred_check_branch
      %37 = sbr.rel (0) target = $region25
    $region24: #{tpu_custom_call.1} parent=1 // pred_region
      %39 = vsyncadd [#allocation6], 0
      %s40 = sshll.u32 %s5, 4
      %s41 = int_to_ptr.hbm [resolvable:$true] %s40
      %s42 = sshll.u32 [#allocation5], 4
      %s43 = int_to_ptr.vmem [resolvable:$true] %s42
      %48 = dma.hbm_to_vmem [thread:$0]  %s41, 1024, %s43, [#allocation6], 64, 64, 4
    $region25: #{tpu_custom_call.1} parent=1 // pred_fallthru
      _
    // Predicated region
    $region26: #{tpu_custom_call.1} parent=1 // pred_check
      _
    $region27: #{tpu_custom_call.1} parent=1 // pred_check_branch
      %50 = sbr.rel (0) target = $region29
    $region28: #{tpu_custom_call.1} parent=1 // pred_region
      _
    $region29: #{tpu_custom_call.1} parent=1 // pred_fallthru
      _
    // Predicated region
    $region30: #{tpu_custom_call.1} parent=1 // pred_check
      _
    $region31: #{tpu_custom_call.1} parent=1 // pred_check_branch
      %52 = sbr.rel (0) target = $region33
    $region32: #{tpu_custom_call.1} parent=1 // pred_region
      %54 = dma.done [#allocation3], 1024
    $region33: #{tpu_custom_call.1} parent=1 // pred_fallthru
      _
    // Predicated region
    $region34: #{tpu_custom_call.1} parent=1 // pred_check
      _
    $region35: #{tpu_custom_call.1} parent=1 // pred_check_branch
      %56 = sbr.rel (0) target = $region37
    $region36: #{tpu_custom_call.1} parent=1 // pred_region
      %58 = dma.done [#allocation6], 1024
    $region37: #{tpu_custom_call.1} parent=1 // pred_fallthru
      _
    %v60 = vld [vmem:[%s0] sm:$0xf]
    %v61 = vld [vmem:[%s0 + $0x4] sm:$0xf]
    %v62 = vld [vmem:[%s0 + $0x8] sm:$0xf]
    %v63 = vld [vmem:[%s0 + $0xc] sm:$0xf]
    %v64 = vld [vmem:[%s1] sm:$0xf]
    %v65 = vld [vmem:[%s1 + $0x4] sm:$0xf]
    %v66 = vld [vmem:[%s1 + $0x8] sm:$0xf]
    %v67 = vld [vmem:[%s2] sm:$0x1]
    %v69 = vperm.slane %v67, 0
    %v75 = vunpack.c.l.b16 %v60
    %v76 = vunpack.c.l.b16 %v61
    %v77 = vunpack.c.l.b16 %v62
    %v78 = vunpack.c.l.b16 %v63
    %v79 = vpack.c.b16 %v76, %v75
    %v80 = vpack.c.b16 %v78, %v77
    %v84 = vunpack.c.l.b16 %v64
    %v85 = vunpack.c.l.b16 %v65
    %v86 = vunpack.c.l.b16 %v66
    %v87 = vpack.c.b16 %v85, %v84
    %v88 = vpack.c.b16 %v86, %v86
    %vm90 = vcmask 195584
    %v92 = vsel %vm90, %v79, 0
    %v95 = vsel %vm90, %v80, 0
    %vm97 = vcmask 1043456
    %v99 = vsel %vm97, %v88, 0
    %101 = vmatpush.bf16.msra.mxu0 0
    %102 = vmatpush.bf16.msra.mxu0 0
    %103 = vmatpush.bf16.msra.mxu0 0
    %104 = vmatpush.bf16.msra.mxu0 0
    %105 = vmatpush.bf16.msra.mxu0 0
    %106 = vmatpush.bf16.msra.mxu0 0
    %107 = vmatpush.bf16.msra.mxu0 %v99
    %108 = vmatpush.bf16.msra.mxu0 %v87
    %109 = vmatmul.bf16.gmra.mxu0 %v92
    %v110 = vpop.f32.mrf.mxu0
    %v111 = vadd.f32 %v69, %v110
    %v112 = vpop.f32.mrf.mxu0
    %v113 = vadd.f32 %v69, %v112
    %114 = vmatmul.bf16.gmra.mxu0 %v95
    %v115 = vpop.f32.mrf.mxu0
    %v116 = vadd.f32 %v69, %v115
    %v117 = vpop.f32.mrf.mxu0
    %v118 = vadd.f32 %v69, %v117
    %119 = vdwg.mxu0
    %v120 = vmax.f32 %v111, 0.0
    %v121 = vmax.f32 %v113, 0.0
    %v122 = vmax.f32 %v116, 0.0
    %v123 = vmax.f32 %v118, 0.0
    %v124 = vpack.c.bf16 %v121, %v120
    %v125 = vpack.c.bf16 %v123, %v122
    %v126 = vld [vmem:[#allocation2] sm:$0xf]
    %v127 = vld [vmem:[#allocation2 + $0x4] sm:$0xf]
    %v128 = vld [vmem:[#allocation2 + $0x8] sm:$0xf]
    %v129 = vld [vmem:[#allocation2 + $0xc] sm:$0xf]
    %v130 = vld [vmem:[#allocation2 + $0x10] sm:$0xf]
    %v131 = vld [vmem:[#allocation2 + $0x14] sm:$0xf]
    %v132 = vld [vmem:[#allocation2 + $0x18] sm:$0xf]
    %v133 = vld [vmem:[#allocation2 + $0x1c] sm:$0xf]
    %v134 = vld [vmem:[#allocation2 + $0x20] sm:$0xf]
    %v135 = vld [vmem:[#allocation2 + $0x24] sm:$0xf]
    %v136 = vld [vmem:[#allocation2 + $0x28] sm:$0xf]
    %v137 = vld [vmem:[#allocation2 + $0x2c] sm:$0xf]
    %v138 = vld [vmem:[#allocation2 + $0x30] sm:$0xf]
    %v139 = vld [vmem:[#allocation2 + $0x34] sm:$0xf]
    %v140 = vld [vmem:[#allocation2 + $0x38] sm:$0xf]
    %v141 = vld [vmem:[#allocation2 + $0x3c] sm:$0xf]
    %v142 = vld [vmem:[%s4] sm:$0x1]
    %v144 = vperm.slane %v142, 0
    %v162 = vunpack.c.l.b16 %v126
    %v163 = vunpack.c.l.b16 %v127
    %v164 = vunpack.c.l.b16 %v128
    %v165 = vunpack.c.l.b16 %v129
    %v166 = vunpack.c.l.b16 %v130
    %v167 = vunpack.c.l.b16 %v131
    %v168 = vunpack.c.l.b16 %v132
    %v169 = vunpack.c.l.b16 %v133
    %v170 = vunpack.c.l.b16 %v134
    %v171 = vunpack.c.l.b16 %v135
    %v172 = vunpack.c.l.b16 %v136
    %v173 = vunpack.c.l.b16 %v137
    %v174 = vunpack.c.l.b16 %v138
    %v175 = vunpack.c.l.b16 %v139
    %v176 = vunpack.c.l.b16 %v140
    %v177 = vunpack.c.l.b16 %v141
    %v178 = vpack.c.b16 %v163, %v162
    %v179 = vpack.c.b16 %v165, %v164
    %v180 = vpack.c.b16 %v167, %v166
    %v181 = vpack.c.b16 %v169, %v168
    %v182 = vpack.c.b16 %v171, %v170
    %v183 = vpack.c.b16 %v173, %v172
    %v184 = vpack.c.b16 %v175, %v174
    %v185 = vpack.c.b16 %v177, %v176
    %194 = vmatpush.bf16.msra.mxu0 %v185
    %195 = vmatpush.bf16.msra.mxu0 %v184
    %196 = vmatpush.bf16.msra.mxu0 %v183
    %197 = vmatpush.bf16.msra.mxu0 %v182
    %198 = vmatpush.bf16.msra.mxu0 %v181
    %199 = vmatpush.bf16.msra.mxu0 %v180
    %200 = vmatpush.bf16.msra.mxu0 %v179
    %201 = vmatpush.bf16.msra.mxu0 %v178
    %202 = vmatmul.bf16.gmra.mxu0 %v124
    %v203 = vpop.f32.mrf.mxu0
    %v204 = vadd.f32 %v144, %v203
    %v205 = vpop.f32.mrf.mxu0
    %v206 = vadd.f32 %v144, %v205
    %207 = vmatmul.bf16.gmra.mxu0 %v125
    %v208 = vpop.f32.mrf.mxu0
    %v209 = vadd.f32 %v144, %v208
    %v210 = vpop.f32.mrf.mxu0
    %v211 = vadd.f32 %v144, %v210
    %212 = vdwg.mxu0
    %v213 = vmax.f32 %v204, 0.0
    %v214 = vmax.f32 %v206, 0.0
    %v215 = vmax.f32 %v209, 0.0
    %v216 = vmax.f32 %v211, 0.0
    %v217 = vpack.c.bf16 %v214, %v213
    %v218 = vpack.c.bf16 %v216, %v215
    %v219 = vld [vmem:[#allocation5] sm:$0xf]
    %v220 = vld [vmem:[#allocation5 + $0x4] sm:$0xf]
    %v221 = vld [vmem:[#allocation5 + $0x8] sm:$0xf]
    %v222 = vld [vmem:[#allocation5 + $0xc] sm:$0xf]
    %v223 = vld [vmem:[#allocation5 + $0x10] sm:$0xf]
    %v224 = vld [vmem:[#allocation5 + $0x14] sm:$0xf]
    %v225 = vld [vmem:[#allocation5 + $0x18] sm:$0xf]
    %v226 = vld [vmem:[#allocation5 + $0x1c] sm:$0xf]
    %v227 = vld [vmem:[#allocation5 + $0x20] sm:$0xf]
    %v228 = vld [vmem:[#allocation5 + $0x24] sm:$0xf]
    %v229 = vld [vmem:[#allocation5 + $0x28] sm:$0xf]
    %v230 = vld [vmem:[#allocation5 + $0x2c] sm:$0xf]
    %v231 = vld [vmem:[#allocation5 + $0x30] sm:$0xf]
    %v232 = vld [vmem:[#allocation5 + $0x34] sm:$0xf]
    %v233 = vld [vmem:[#allocation5 + $0x38] sm:$0xf]
    %v234 = vld [vmem:[#allocation5 + $0x3c] sm:$0xf]
    %v235 = vld [vmem:[%s6] sm:$0x1]
    %v237 = vperm.slane %v235, 0
    %v255 = vunpack.c.l.b16 %v219
    %v256 = vunpack.c.l.b16 %v220
    %v257 = vunpack.c.l.b16 %v221
    %v258 = vunpack.c.l.b16 %v222
    %v259 = vunpack.c.l.b16 %v223
    %v260 = vunpack.c.l.b16 %v224
    %v261 = vunpack.c.l.b16 %v225
    %v262 = vunpack.c.l.b16 %v226
    %v263 = vunpack.c.l.b16 %v227
    %v264 = vunpack.c.l.b16 %v228
    %v265 = vunpack.c.l.b16 %v229
    %v266 = vunpack.c.l.b16 %v230
    %v267 = vunpack.c.l.b16 %v231
    %v268 = vunpack.c.l.b16 %v232
    %v269 = vunpack.c.l.b16 %v233
    %v270 = vunpack.c.l.b16 %v234
    %v271 = vpack.c.b16 %v256, %v255
    %v272 = vpack.c.b16 %v258, %v257
    %v273 = vpack.c.b16 %v260, %v259
    %v274 = vpack.c.b16 %v262, %v261
    %v275 = vpack.c.b16 %v264, %v263
    %v276 = vpack.c.b16 %v266, %v265
    %v277 = vpack.c.b16 %v268, %v267
    %v278 = vpack.c.b16 %v270, %v269
    %287 = vmatpush.bf16.msra.mxu0 %v278
    %288 = vmatpush.bf16.msra.mxu0 %v277
    %289 = vmatpush.bf16.msra.mxu0 %v276
    %290 = vmatpush.bf16.msra.mxu0 %v275
    %291 = vmatpush.bf16.msra.mxu0 %v274
    %292 = vmatpush.bf16.msra.mxu0 %v273
    %293 = vmatpush.bf16.msra.mxu0 %v272
    %294 = vmatpush.bf16.msra.mxu0 %v271
    %295 = vmatmul.bf16.gmra.mxu0 %v217
    %v296 = vpop.f32.mrf.mxu0
    %v297 = vadd.f32 %v237, %v296
    %v298 = vpop.f32.mrf.mxu0
    %v299 = vadd.f32 %v237, %v298
    %300 = vmatmul.bf16.gmra.mxu0 %v218
    %v301 = vpop.f32.mrf.mxu0
    %v302 = vadd.f32 %v237, %v301
    %v303 = vpop.f32.mrf.mxu0
    %v304 = vadd.f32 %v237, %v303
    %305 = vdwg.mxu0
    %306 = vst [vmem:[#allocation7] sm:$0xff] %v297
    %307 = vst [vmem:[#allocation7 + $0x8] sm:$0xff] %v299
    %308 = vst [vmem:[#allocation7 + $0x10] sm:$0xff] %v302
    %309 = vst [vmem:[#allocation7 + $0x18] sm:$0xff] %v304
    // Predicated region
    $region38: #{tpu_custom_call.1} parent=1 // pred_check
      _
    $region39: #{tpu_custom_call.1} parent=1 // pred_check_branch
      %311 = sbr.rel (0) target = $region41
    $region40: #{tpu_custom_call.1} parent=1 // pred_region
      %313 = vsyncadd [#allocation4], 0
      %s314 = sshll.u32 [#allocation7], 4
      %s315 = int_to_ptr.vmem [resolvable:$true] %s314
      %s316 = sshll.u32 %s7, 4
      %s317 = int_to_ptr.hbm [resolvable:$true] %s316
      %322 = dma.vmem_to_hbm [thread:$0]  %s315, 512, %s317, [#allocation4], 128, 128, 8
    $region41: #{tpu_custom_call.1} parent=1 // pred_fallthru
      _
    // Predicated region
    $region42: #{tpu_custom_call.1} parent=1 // pred_check
      _
    $region43: #{tpu_custom_call.1} parent=1 // pred_check_branch
      %324 = sbr.rel (0) target = $region45
    $region44: #{tpu_custom_call.1} parent=1 // pred_region
      %326 = dma.done [#allocation4], 512
    $region45: #{tpu_custom_call.1} parent=1 // pred_fallthru
      _
    %327 = vsyncpa [#allocation3], 1
    %328 = vsyncpa [#allocation6], 1
    %329 = vsyncpa [#allocation4], 1

</llo_original>
